<compile_context>
chip_gen: v7x
topology: tpu7x:2x2x1
jax: 0.10.0
libtpu: 0.0.40
codegen_flags: <defaults>
</compile_context>

<pallas_src>
import jax
import jax.numpy as jnp
from jax.experimental import pallas as pl
from jax.experimental.pallas import tpu as pltpu


def _make_kernel(C, E, inv_L):
    """Kernel closure over the static channel/edge counts and the 1/L divisor."""

    def node_model_kernel(edge_ref, params_ref, out_ref):
        edge_in = edge_ref[...]                        # (E, LP)  f32, lane-dense
        params = params_ref[...]                       # (C+2, W) f32, single slab

        w3 = params[:C, :E]                            # (C, E)  conv3 weight (k=1)
        b3 = params[:C, E:E + 1]                       # (C, 1)  conv3 bias
        red_mat = params[C:C + 2, :C]                  # (2, C)  [ones ; w4]
        b4 = params[C + 1:C + 2, C:C + 1]              # (1, 1)  conv4 bias

        # conv3 (k=1) + bias + ReLU: one small MXU matmul on the full lane width.
        edge = jnp.maximum(
            jnp.dot(w3, edge_in, preferred_element_type=jnp.float32) + b3, 0.0)  # (C, LP)

        # Fused reduction (one MXU matmul):
        #   row 0 = colsum_C(edge)  (edge2node aggregation)
        #   row 1 = w4 @ edge       (conv4 logits, pre-bias)
        red = jnp.dot(red_mat, edge, preferred_element_type=jnp.float32)          # (2, LP)
        col_sum = red[0:1, :]                                                      # (1, LP)
        logits = red[1:2, :] + b4                                                  # (1, LP)

        # sigmoid = 1 / (1 + exp(-x));  exact reciprocal (EUP has slack).
        rel_type = pl.reciprocal(1.0 + jnp.exp(-logits), approx=False)

        # edge2node, fused: colsum(edge + edge*rel) == colsum(edge) * (1 + rel).
        out_ref[...] = col_sum * (1.0 + rel_type) * inv_L                          # (1, LP)

    return node_model_kernel


def _pack_params(w3, b3, w4, b4):
    """Pack conv3/conv4 params + the [ones; w4] reduce matrix into one f32 slab.

    Layout (C+2, W) with W = max(E+1, C+1):
      rows [0, C)  : [ w3 (C,E) | b3 (C,1) | 0-pad ]
      row  C       : [ ones(C)            | 0-pad ]   (edge2node column sum)
      row  C+1     : [ w4 (C)   | b4      | 0-pad ]   (conv4 weight row + bias)
    """
    C, E = w3.shape
    W = max(E + 1, C + 1)
    slab = jnp.zeros((C + 2, W), jnp.float32)
    slab = slab.at[:C, :E].set(jnp.asarray(w3, jnp.float32))
    slab = slab.at[:C, E].set(jnp.asarray(b3, jnp.float32).reshape(C))
    slab = slab.at[C, :C].set(1.0)
    slab = slab.at[C + 1, :C].set(jnp.asarray(w4, jnp.float32).reshape(C))
    slab = slab.at[C + 1, C].set(jnp.asarray(b4, jnp.float32).reshape(()))
    return slab


def node_model_forward_batched(edge_attr_b, w3, b3, w4, b4, *, node_num):
    """B independent NodeModel forwards in ONE single-step pallas_call.

    edge_attr_b: (B, E, L).  Returns (B, node_num, L) float32.
    """
    B, E, L = edge_attr_b.shape
    C = w3.shape[0]
    BL = B * L
    LP = max(128, pl.cdiv(BL, 128) * 128)              # lane-dense width

    # Fold the batch into the lane axis (the math is column-independent, so this
    # is a pure layout change), then zero-pad to a multiple of 128 lanes.
    edge2d = jnp.transpose(edge_attr_b.astype(jnp.float32), (1, 0, 2)).reshape(E, BL)
    edge2d = jnp.pad(edge2d, ((0, 0), (0, LP - BL)))    # (E, LP)

    params = _pack_params(w3, b3, w4, b4)               # (C+2, W), one DMA
    W = params.shape[1]

    cost = pl.CostEstimate(
        flops=2 * C * E * LP + 2 * 2 * C * LP + 8 * LP,
        transcendentals=2 * LP,
        bytes_accessed=4 * (E * LP + (C + 2) * W + LP),
    )

    row = pl.pallas_call(
        _make_kernel(C, E, 1.0 / float(L)),
        out_shape=jax.ShapeDtypeStruct((1, LP), jnp.float32),
        grid=(1,),                                      # single step: no serial grid overhead
        in_specs=[
            pl.BlockSpec((E, LP), lambda i: (0, 0)),    # folded, lane-padded edges
            pl.BlockSpec((C + 2, W), lambda i: (0, 0)), # packed parameter slab
        ],
        out_specs=pl.BlockSpec((1, LP), lambda i: (0, 0)),
        compiler_params=pltpu.CompilerParams(
            dimension_semantics=("arbitrary",)),
        cost_estimate=cost,
    )(edge2d, params)                                    # (1, LP)

    # Unfold lanes -> (B, 1, L); every node row is identical, so the node_num
    # broadcast stays outside the kernel (free XLA broadcast).
    out_rows = row[0, :BL].reshape(B, 1, L)
    return jnp.broadcast_to(out_rows, (B, node_num, L))


def node_model_forward(x, edge_attr, w3, b3, w4, b4):
    """Single-example forward matching NodeModel.forward(x, edge_index, edge_attr)."""
    node_num = x.shape[0]
    out = node_model_forward_batched(edge_attr[None], w3, b3, w4, b4,
                                     node_num=node_num)
    return out[0]


def _reference(x, edge_attr, w3, b3, w4, b4):
    """Pure-JAX reference of the PyTorch forward, for verification."""
    edge = jnp.maximum(w3 @ edge_attr + b3[:, None], 0.0)        # (C, L)
    rel = jax.nn.sigmoid(w4 @ edge + b4[:, None])                # (1, L)
    edge2 = edge + edge * rel
    rel_ones = jnp.ones((x.shape[0], edge2.shape[0]), jnp.float32)
    incoming = rel_ones @ edge2                                  # (node_num, L)
    return incoming / incoming.shape[1]


if __name__ == "__main__":
    # Small shapes consistent with the module:
    #   node_num=4, node_h=8 (x), E=8 edges of length L=16,
    #   channel_dim=16, time_reduce_size=1 -> C = channel_dim*time_reduce*2 = 32
    # Plus B=4 independent forwards batched (folded into lanes) in one pallas_call.
    N, NODE_H = 4, 8
    E, L = 8, 16
    CHANNEL_DIM, TIME_REDUCE = 16, 1
    C = CHANNEL_DIM * TIME_REDUCE * 2
    B = 4

    key = jax.random.PRNGKey(0)
    kx, ke, kw3, kb3, kw4, kb4 = jax.random.split(key, 6)

    x = jax.random.normal(kx, (N, NODE_H), jnp.float32)
    edge_attr_b = jax.random.normal(ke, (B, E, L), jnp.float32)

    # Deterministic Conv1d-style init (uniform(-1/sqrt(fan_in), 1/sqrt(fan_in)))
    bound3 = 1.0 / (E ** 0.5)
    w3 = jax.random.uniform(kw3, (C, E), jnp.float32, -bound3, bound3)   # conv3.weight (k=1)
    b3 = jax.random.uniform(kb3, (C,), jnp.float32, -bound3, bound3)     # conv3.bias
    bound4 = 1.0 / (C ** 0.5)
    w4 = jax.random.uniform(kw4, (1, C), jnp.float32, -bound4, bound4)   # conv4.weight (k=1)
    b4 = jax.random.uniform(kb4, (1,), jnp.float32, -bound4, bound4)     # conv4.bias

    # Batched path: B forwards, one launch, single lane-dense grid step.
    out_b = node_model_forward_batched(edge_attr_b, w3, b3, w4, b4, node_num=N)
    out_b = jax.block_until_ready(out_b)
    assert out_b.shape == (B, N, L), out_b.shape

    # Single-example path (module semantics).
    out0 = node_model_forward(x, edge_attr_b[0], w3, b3, w4, b4)
    out0 = jax.block_until_ready(out0)
    assert out0.shape == (N, L), out0.shape

    # Verify against the pure-JAX reference.
    for b in range(B):
        ref = _reference(x, edge_attr_b[b], w3, b3, w4, b4)
        assert jnp.allclose(out_b[b], ref, atol=2e-3, rtol=2e-3), \
            f"mismatch vs reference at batch {b}"
    assert jnp.allclose(out0, out_b[0], atol=1e-6, rtol=1e-6), \
        "single-example path disagrees with batched path"

    print("KERNEL_OK")
</pallas_src>

<mosaic_0001>
module attributes {stable_mosaic.version = 11 : i64} {
  func.func @node_model_kernel(%arg0: i32, %arg1: memref<8x128xf32, #tpu.memory_space<vmem>>, %arg2: memref<34x33xf32, #tpu.memory_space<vmem>>, %arg3: memref<1x128xf32, #tpu.memory_space<vmem>>) attributes {dimension_semantics = [#tpu.dimension_semantics<arbitrary>], iteration_bounds = array<i64: 1>, scalar_prefetch = 0 : i64, scratch_operands = 0 : i64, tpu.core_type = #tpu.core_type<tc>, window_params = [{pipeline_mode = #tpu.pipeline_mode<synchronous>, transform_indices = @transform_0, window_bounds = array<i64: 8, 128>}, {pipeline_mode = #tpu.pipeline_mode<synchronous>, transform_indices = @transform_1, window_bounds = array<i64: 34, 33>}, {pipeline_mode = #tpu.pipeline_mode<synchronous>, transform_indices = @transform_2, window_bounds = array<i64: 1, 128>}]} {
    %c0 = arith.constant 0 : index
    %c0_0 = arith.constant 0 : index
    %0 = vector.load %arg1[%c0, %c0_0] : memref<8x128xf32, #tpu.memory_space<vmem>>, vector<8x128xf32>
    %c0_1 = arith.constant 0 : index
    %c0_2 = arith.constant 0 : index
    %1 = vector.load %arg2[%c0_1, %c0_2] : memref<34x33xf32, #tpu.memory_space<vmem>>, vector<34x33xf32>
    %2 = vector.extract_strided_slice %1 {offsets = [0, 0], sizes = [32, 8], strides = [1, 1]} : vector<34x33xf32> to vector<32x8xf32>
    %3 = vector.extract_strided_slice %1 {offsets = [0, 8], sizes = [32, 1], strides = [1, 1]} : vector<34x33xf32> to vector<32x1xf32>
    %4 = vector.extract_strided_slice %1 {offsets = [32, 0], sizes = [2, 32], strides = [1, 1]} : vector<34x33xf32> to vector<2x32xf32>
    %5 = vector.extract_strided_slice %1 {offsets = [33, 32], sizes = [1, 1], strides = [1, 1]} : vector<34x33xf32> to vector<1x1xf32>
    %cst = arith.constant dense<0.000000e+00> : vector<32x128xf32>
    %6 = tpu.matmul %2, %0, %cst {dimension_numbers = #tpu.dot_dimension_numbers<[1], [0], [0], [1], [0, 0, 1, 1], [], []>} : vector<32x8xf32>, vector<8x128xf32>, vector<32x128xf32> -> vector<32x128xf32>
    %7 = vector.broadcast %3 : vector<32x1xf32> to vector<32x128xf32>
    %8 = arith.addf %6, %7 : vector<32x128xf32>
    %cst_3 = arith.constant 0.000000e+00 : f32
    %9 = vector.broadcast %cst_3 : f32 to vector<32x128xf32>
    %10 = arith.maximumf %8, %9 : vector<32x128xf32>
    %cst_4 = arith.constant dense<0.000000e+00> : vector<2x128xf32>
    %11 = tpu.matmul %4, %10, %cst_4 {dimension_numbers = #tpu.dot_dimension_numbers<[1], [0], [0], [1], [0, 0, 1, 1], [], []>} : vector<2x32xf32>, vector<32x128xf32>, vector<2x128xf32> -> vector<2x128xf32>
    %12 = vector.extract_strided_slice %11 {offsets = [0, 0], sizes = [1, 128], strides = [1, 1]} : vector<2x128xf32> to vector<1x128xf32>
    %13 = vector.extract_strided_slice %11 {offsets = [1, 0], sizes = [1, 128], strides = [1, 1]} : vector<2x128xf32> to vector<1x128xf32>
    %14 = vector.broadcast %5 : vector<1x1xf32> to vector<1x128xf32>
    %15 = arith.addf %13, %14 : vector<1x128xf32>
    %cst_5 = arith.constant 0.000000e+00 : f32
    %16 = vector.broadcast %cst_5 : f32 to vector<1x128xf32>
    %17 = arith.subf %16, %15 : vector<1x128xf32>
    %18 = math.exp %17 : vector<1x128xf32>
    %cst_6 = arith.constant 1.000000e+00 : f32
    %19 = vector.broadcast %cst_6 : f32 to vector<1x128xf32>
    %20 = arith.addf %19, %18 : vector<1x128xf32>
    %21 = tpu.reciprocal %20 : vector<1x128xf32> -> vector<1x128xf32>
    %cst_7 = arith.constant 1.000000e+00 : f32
    %22 = vector.broadcast %cst_7 : f32 to vector<1x128xf32>
    %23 = arith.addf %22, %21 : vector<1x128xf32>
    %24 = arith.mulf %12, %23 : vector<1x128xf32>
    %cst_8 = arith.constant 6.250000e-02 : f32
    %25 = vector.broadcast %cst_8 : f32 to vector<1x128xf32>
    %26 = arith.mulf %24, %25 : vector<1x128xf32>
    %c0_9 = arith.constant 0 : index
    %c0_10 = arith.constant 0 : index
    %27 = vector.load %arg3[%c0_9, %c0_10] : memref<1x128xf32, #tpu.memory_space<vmem>>, vector<1x128xf32>
    tpu.vector_store %arg3[%c0_9, %c0_10], %26 {strides = array<i32>} : memref<1x128xf32, #tpu.memory_space<vmem>>, vector<1x128xf32>,
    return
  }
  func.func @transform_0(%arg0: i32) -> (i32, i32) {
    %c0_i32 = arith.constant 0 : i32
    %c0_i32_0 = arith.constant 0 : i32
    %c0_i32_1 = arith.constant 0 : i32
    return %c0_i32, %c0_i32_0 : i32, i32
  }
  func.func @transform_1(%arg0: i32) -> (i32, i32) {
    %c0_i32 = arith.constant 0 : i32
    %c0_i32_0 = arith.constant 0 : i32
    %c0_i32_1 = arith.constant 0 : i32
    return %c0_i32, %c0_i32_0 : i32, i32
  }
  func.func @transform_2(%arg0: i32) -> (i32, i32) {
    %c0_i32 = arith.constant 0 : i32
    %c0_i32_0 = arith.constant 0 : i32
    %c0_i32_1 = arith.constant 0 : i32
    return %c0_i32, %c0_i32_0 : i32, i32
  }
}

</mosaic_0001>

<llo_original>
// kernel: tpu_custom_call.1
$region0: #{tpu_custom_call.1}
  #allocation0 [shape = 'u32[]', space=smem, size = 0x4, offset = 0x4, fixed_abs, tag = 'smem constant byte address 0x4 - core index']
  #allocation1 [shape = 'u32[144,128]{1,0:T(1,128)}', space=vmem, size = 0x12000, scoped, tag = 'internal scratch']
  %s0 = inlined_call_operand.hbm [shape: f32[8,128], index: 0, kind: input, shape index: {}]
  %s1 = inlined_call_operand.hbm [shape: f32[34,33], index: 1, kind: input, shape index: {}]
  %s2 = inlined_call_operand.hbm [shape: f32[1,128], index: 2, kind: output, shape index: {}]
  %s3 = sld [smem:[#allocation0]]
  $region26: #{tpu_custom_call.1} parent=0
    _
  %s5 = ssub.s32 1, %s3
  %s6 = scalar_select 0, %s5, %s3
  $region1: #{tpu_custom_call.1} parent=0
    #allocation2 [shape = 'u8[4096]{0}', space=vmem, size = 0x1000, scoped, tag = 'input window, operand 0, single buffered']
    #allocation3 [shape = 's32[1]{0}', space=sflag, size = 0x4, scoped, tag = 'scoped memory for tpu_custom_call.1']
    #allocation4 [shape = 's32[1]{0}', space=sflag, size = 0x4, scoped, tag = 'scoped memory for tpu_custom_call.1']
    #allocation5 [shape = 'u8[20480]{0}', space=vmem, size = 0x5000, scoped, tag = 'input window, operand 1, single buffered']
    #allocation6 [shape = 's32[1]{0}', space=sflag, size = 0x4, scoped, tag = 'scoped memory for tpu_custom_call.1']
    #allocation7 [shape = 'u8[512]{0}', space=vmem, size = 0x400, scoped, tag = 'output window, operand 0, single buffered']
    %7 = vsyncpa [#allocation3], 0
    %8 = vsyncpa [#allocation6], 0
    %9 = vsyncpa [#allocation4], 0
    // Predicated region
    $region2: #{tpu_custom_call.1} parent=1 // pred_check
      _
    $region3: #{tpu_custom_call.1} parent=1 // pred_check_branch
      %11 = sbr.rel (0) target = $region5
    $region4: #{tpu_custom_call.1} parent=1 // pred_region
      %s13 = ssub.s32 128, 128
      %14 = vsyncadd [#allocation3], %s13
      %s16 = sshll.u32 [#allocation2], 4
      %s17 = int_to_ptr.vmem [resolvable:$true] %s16
      %19 = dma.hbm_to_vmem [thread:$0]  %s0, 128, %s17, [#allocation3]
    $region5: #{tpu_custom_call.1} parent=1 // pred_fallthru
      _
    // Predicated region
    $region6: #{tpu_custom_call.1} parent=1 // pred_check
      _
    $region7: #{tpu_custom_call.1} parent=1 // pred_check_branch
      %21 = sbr.rel (0) target = $region9
    $region8: #{tpu_custom_call.1} parent=1 // pred_region
      %s23 = ssub.s32 640, 640
      %24 = vsyncadd [#allocation6], %s23
      %s25 = sshll.u32 [#allocation5], 4
      %s26 = int_to_ptr.vmem [resolvable:$true] %s25
      %31 = dma.hbm_to_vmem [thread:$0]  %s1, 640, %s26, [#allocation6], 128, 128, 8
    $region9: #{tpu_custom_call.1} parent=1 // pred_fallthru
      _
    // Predicated region
    $region10: #{tpu_custom_call.1} parent=1 // pred_check
      _
    $region11: #{tpu_custom_call.1} parent=1 // pred_check_branch
      %33 = sbr.rel (0) target = $region13
    $region12: #{tpu_custom_call.1} parent=1 // pred_region
      %34 = dma.done [#allocation3], 128
    $region13: #{tpu_custom_call.1} parent=1 // pred_fallthru
      _
    // Predicated region
    $region14: #{tpu_custom_call.1} parent=1 // pred_check
      _
    $region15: #{tpu_custom_call.1} parent=1 // pred_check_branch
      %36 = sbr.rel (0) target = $region17
    $region16: #{tpu_custom_call.1} parent=1 // pred_region
      %37 = dma.done [#allocation6], 640
    $region17: #{tpu_custom_call.1} parent=1 // pred_fallthru
      _
    %v38 = vld [vmem:[#allocation2] sm:$0xff]
    %v39 = vld [vmem:[#allocation5] sm:$0xff]
    %v40 = vld [vmem:[#allocation5 + $0x8] sm:$0xff]
    %v41 = vld [vmem:[#allocation5 + $0x10] sm:$0xff]
    %v42 = vld [vmem:[#allocation5 + $0x18] sm:$0xff]
    %v43 = vld [vmem:[#allocation5 + $0x20] sm:$0x3]
    %45 = vset.pattern.permute.xlu0 8
    %46 = vperm.xlu0 %45, %v39
    %v47 = vpop.permute.xlu0 %46
    %50 = vset.pattern.permute.xlu0 8
    %51 = vperm.xlu0 %50, %v40
    %v52 = vpop.permute.xlu0 %51
    %55 = vset.pattern.permute.xlu0 8
    %56 = vperm.xlu0 %55, %v41
    %v57 = vpop.permute.xlu0 %56
    %60 = vset.pattern.permute.xlu0 8
    %61 = vperm.xlu0 %60, %v42
    %v62 = vpop.permute.xlu0 %61
    %vm64 = vcmask 64512
    %v65 = vsel %vm64, %v39, 0
    %v67 = vsel %vm64, %v40, 0
    %v69 = vsel %vm64, %v41, 0
    %v71 = vsel %vm64, %v42, 0
    %73 = vmatprep.subr.mxu0 0.0
    %74 = vmatpush1.msra.mxu0 %v38
    %75 = vmatprep.subr.mxu0 0.0
    %76 = vmatpush1.msra.mxu0 0.0
    %77 = vmatprep.subr.mxu0 0.0
    %78 = vmatpush1.msra.mxu0 0.0
    %79 = vmatprep.subr.mxu0 0.0
    %80 = vmatpush1.msra.mxu0 0.0
    %81 = vmatprep.subr.mxu0 0.0
    %82 = vmatpush1.msra.mxu0 0.0
    %83 = vmatprep.subr.mxu0 0.0
    %84 = vmatpush1.msra.mxu0 0.0
    %85 = vmatprep.subr.mxu0 0.0
    %86 = vmatpush1.msra.mxu0 0.0
    %87 = vmatprep.subr.mxu0 0.0
    %88 = vmatpush1.msra.mxu0 0.0
    %89 = vmatprep.subr.mxu0 0.0
    %90 = vmatpush1.msra.mxu0 0.0
    %91 = vmatprep.subr.mxu0 0.0
    %92 = vmatpush1.msra.mxu0 0.0
    %93 = vmatprep.subr.mxu0 0.0
    %94 = vmatpush1.msra.mxu0 0.0
    %95 = vmatprep.subr.mxu0 0.0
    %96 = vmatpush1.msra.mxu0 0.0
    %97 = vmatprep.subr.mxu0 0.0
    %98 = vmatpush1.msra.mxu0 0.0
    %99 = vmatprep.subr.mxu0 0.0
    %100 = vmatpush1.msra.mxu0 0.0
    %101 = vmatprep.subr.mxu0 0.0
    %102 = vmatpush1.msra.mxu0 0.0
    %103 = vmatprep.subr.mxu0 0.0
    %104 = vmatpush1.msra.mxu0 0.0
    %105 = vmatprep.subr.mxu0 0.0
    %106 = vmatpush1.msra.mxu0 0.0
    %107 = vmatprep.subr.mxu0 0.0
    %108 = vmatpush1.msra.mxu0 0.0
    %109 = vmatprep.subr.mxu0 0.0
    %110 = vmatpush1.msra.mxu0 0.0
    %111 = vmatprep.subr.mxu0 0.0
    %112 = vmatpush1.msra.mxu0 0.0
    %113 = vmatprep.subr.mxu0 0.0
    %114 = vmatpush1.msra.mxu0 0.0
    %115 = vmatprep.subr.mxu0 0.0
    %116 = vmatpush1.msra.mxu0 0.0
    %117 = vmatprep.subr.mxu0 0.0
    %118 = vmatpush1.msra.mxu0 0.0
    %119 = vmatprep.subr.mxu0 0.0
    %120 = vmatpush1.msra.mxu0 0.0
    %121 = vmatprep.subr.mxu0 0.0
    %122 = vmatpush1.msra.mxu0 0.0
    %123 = vmatprep.subr.mxu0 0.0
    %124 = vmatpush1.msra.mxu0 0.0
    %125 = vmatprep.subr.mxu0 0.0
    %126 = vmatpush1.msra.mxu0 0.0
    %127 = vmatprep.subr.mxu0 0.0
    %128 = vmatpush1.msra.mxu0 0.0
    %129 = vmatprep.subr.mxu0 0.0
    %130 = vmatpush1.msra.mxu0 0.0
    %131 = vmatprep.subr.mxu0 0.0
    %132 = vmatpush1.msra.mxu0 0.0
    %133 = vmatprep.subr.mxu0 0.0
    %134 = vmatpush1.msra.mxu0 0.0
    %135 = vmatprep.subr.mxu0 0.0
    %136 = vmatpush1.msra.mxu0 0.0
    %137 = vmatprep.mubr.f32.mxu0 0.0
    %138 = vmatmul.mubr.f32.gmra.mrb[0].mxu0 %v65
    %v139 = vpop.f32.mrb[0].mxu0
    %v140 = vadd.f32 %v47, %v139
    %v141 = vpop.f32.mrb[0].mxu0
    %142 = vmatprep.mubr.f32.mxu0 0.0
    %143 = vmatmul.mubr.f32.gmra.mrb[0].mxu0 %v67
    %v144 = vpop.f32.mrb[0].mxu0
    %v145 = vadd.f32 %v52, %v144
    %v146 = vpop.f32.mrb[0].mxu0
    %147 = vmatprep.mubr.f32.mxu0 0.0
    %148 = vmatmul.mubr.f32.gmra.mrb[0].mxu0 %v69
    %v149 = vpop.f32.mrb[0].mxu0
    %v150 = vadd.f32 %v57, %v149
    %v151 = vpop.f32.mrb[0].mxu0
    %152 = vmatprep.mubr.f32.mxu0 0.0
    %153 = vmatmul.mubr.f32.gmra.mrb[0].mxu0 %v71
    %v154 = vpop.f32.mrb[0].mxu0
    %v155 = vadd.f32 %v62, %v154
    %v156 = vpop.f32.mrb[0].mxu0
    %157 = vdwg.mxu0
    %v158 = vmax.f32 %v140, 0.0
    %v159 = vmax.f32 %v145, 0.0
    %v160 = vmax.f32 %v150, 0.0
    %v161 = vmax.f32 %v155, 0.0
    %vm162 = vcmask 261120
    %v164 = vsel %vm162, %v43, 0
    %166 = vmatprep.subr.mxu0 0.0
    %167 = vmatpush1.msra.mxu0 %v158
    %168 = vmatprep.subr.mxu0 0.0
    %169 = vmatpush1.msra.mxu0 %v159
    %170 = vmatprep.subr.mxu0 0.0
    %171 = vmatpush1.msra.mxu0 %v160
    %172 = vmatprep.subr.mxu0 0.0
    %173 = vmatpush1.msra.mxu0 %v161
    %174 = vmatprep.subr.mxu0 0.0
    %175 = vmatpush1.msra.mxu0 0.0
    %176 = vmatprep.subr.mxu0 0.0
    %177 = vmatpush1.msra.mxu0 0.0
    %178 = vmatprep.subr.mxu0 0.0
    %179 = vmatpush1.msra.mxu0 0.0
    %180 = vmatprep.subr.mxu0 0.0
    %181 = vmatpush1.msra.mxu0 0.0
    %182 = vmatprep.subr.mxu0 0.0
    %183 = vmatpush1.msra.mxu0 0.0
    %184 = vmatprep.subr.mxu0 0.0
    %185 = vmatpush1.msra.mxu0 0.0
    %186 = vmatprep.subr.mxu0 0.0
    %187 = vmatpush1.msra.mxu0 0.0
    %188 = vmatprep.subr.mxu0 0.0
    %189 = vmatpush1.msra.mxu0 0.0
    %190 = vmatprep.subr.mxu0 0.0
    %191 = vmatpush1.msra.mxu0 0.0
    %192 = vmatprep.subr.mxu0 0.0
    %193 = vmatpush1.msra.mxu0 0.0
    %194 = vmatprep.subr.mxu0 0.0
    %195 = vmatpush1.msra.mxu0 0.0
    %196 = vmatprep.subr.mxu0 0.0
    %197 = vmatpush1.msra.mxu0 0.0
    %198 = vmatprep.subr.mxu0 0.0
    %199 = vmatpush1.msra.mxu0 0.0
    %200 = vmatprep.subr.mxu0 0.0
    %201 = vmatpush1.msra.mxu0 0.0
    %202 = vmatprep.subr.mxu0 0.0
    %203 = vmatpush1.msra.mxu0 0.0
    %204 = vmatprep.subr.mxu0 0.0
    %205 = vmatpush1.msra.mxu0 0.0
    %206 = vmatprep.subr.mxu0 0.0
    %207 = vmatpush1.msra.mxu0 0.0
    %208 = vmatprep.subr.mxu0 0.0
    %209 = vmatpush1.msra.mxu0 0.0
    %210 = vmatprep.subr.mxu0 0.0
    %211 = vmatpush1.msra.mxu0 0.0
    %212 = vmatprep.subr.mxu0 0.0
    %213 = vmatpush1.msra.mxu0 0.0
    %214 = vmatprep.subr.mxu0 0.0
    %215 = vmatpush1.msra.mxu0 0.0
    %216 = vmatprep.subr.mxu0 0.0
    %217 = vmatpush1.msra.mxu0 0.0
    %218 = vmatprep.subr.mxu0 0.0
    %219 = vmatpush1.msra.mxu0 0.0
    %220 = vmatprep.subr.mxu0 0.0
    %221 = vmatpush1.msra.mxu0 0.0
    %222 = vmatprep.subr.mxu0 0.0
    %223 = vmatpush1.msra.mxu0 0.0
    %224 = vmatprep.subr.mxu0 0.0
    %225 = vmatpush1.msra.mxu0 0.0
    %226 = vmatprep.subr.mxu0 0.0
    %227 = vmatpush1.msra.mxu0 0.0
    %228 = vmatprep.subr.mxu0 0.0
    %229 = vmatpush1.msra.mxu0 0.0
    %230 = vmatprep.mubr.f32.mxu0 0.0
    %231 = vmatmul.mubr.f32.gmra.mrb[0].mxu0 %v164
    %v232 = vpop.f32.mrb[0].mxu0
    %v233 = vadd.f32 0.0, %v232
    %v234 = vpop.f32.mrb[0].mxu0
    %235 = vdwg.mxu0
    %236 = vset.pattern.permute.xlu0 32
    %237 = vperm.xlu0 %236, %v43
    %v238 = vpop.permute.xlu0 %237
    %v240 = vadd.f32 %v233, %v238
    %v241 = vsub.f32 0.0, %v240
    %v242 = vmul.f32 %v241, 1.442695
    %v243 = vpow.pop %v242
    %v244 = vadd.f32 %v243, 1.0
    %v245 = vrcp.pop %v244
    %v246 = vadd.f32 %v245, 1.0
    %v248 = vrot.slane %v246, 1
    %v250 = vmul.f32 %v233, %v248
    %v251 = vmul.f32 %v250, 0.0625
    %252 = vst [vmem:[#allocation7] sm:$0x1] %v251
    // Predicated region
    $region18: #{tpu_custom_call.1} parent=1 // pred_check
      _
    $region19: #{tpu_custom_call.1} parent=1 // pred_check_branch
      %254 = sbr.rel (0) target = $region21
    $region20: #{tpu_custom_call.1} parent=1 // pred_region
      %s256 = ssub.s32 16, 16
      %257 = vsyncadd [#allocation4], %s256
      %s259 = sshll.u32 [#allocation7], 4
      %s260 = int_to_ptr.vmem [resolvable:$true] %s259
      %262 = dma.vmem_to_hbm [thread:$0]  %s260, 16, %s2, [#allocation4]
    $region21: #{tpu_custom_call.1} parent=1 // pred_fallthru
      _
    // Predicated region
    $region22: #{tpu_custom_call.1} parent=1 // pred_check
      _
    $region23: #{tpu_custom_call.1} parent=1 // pred_check_branch
      %264 = sbr.rel (0) target = $region25
    $region24: #{tpu_custom_call.1} parent=1 // pred_region
      %265 = dma.done [#allocation4], 16
    $region25: #{tpu_custom_call.1} parent=1 // pred_fallthru
      _
    %266 = vsyncpa [#allocation3], 1
    %267 = vsyncpa [#allocation6], 1
    %268 = vsyncpa [#allocation4], 1

</llo_original>
